<compile_context>
chip_gen: v5e
topology: v5e:2x2
jax: 0.10.0
libtpu: 0.0.40
codegen_flags: <defaults>
</compile_context>

<pallas_src>
import functools

import jax
import jax.numpy as jnp
import numpy as np
from jax.experimental import pallas as pl
from jax.experimental.pallas import tpu as pltpu


# -----------------------------------------------------------------------------
# Pallas kernel: one (direction, T-tile) grid step of the bidirectional GRU.
#   grid = (2, nT); axis 0 = direction (parallel), axis 1 = T tiles (arbitrary).
#   gi_ref : (T_tile, B, 3H)  precomputed x @ W_ih + b_ih for this tile
#   whh_ref: (H, 3H), bhh_ref: (1, 3H), len_ref: (B, 1) int32
#   out_ref: (T_tile, B, H),  hN_ref: (B, H),  h_ref: VMEM scratch (B, H)
# -----------------------------------------------------------------------------
def _bigru_kernel(len_ref, gi_ref, whh_ref, bhh_ref, out_ref, hN_ref, h_ref):
    T_tile, B, G = gi_ref.shape
    H = G // 3

    d = pl.program_id(0)          # 0 = forward, 1 = backward
    j = pl.program_id(1)          # T-tile index (innermost grid axis)
    nT = pl.num_programs(1)

    # Reset the carried hidden state at the start of each direction's sweep.
    @pl.when(j == 0)
    def _():
        h_ref[...] = jnp.zeros_like(h_ref)

    # Hoisted out of the time loop.
    whh = whh_ref[...]            # (H, 3H)   gates [r | z | n] along lanes
    bhh = bhh_ref[...]            # (1, 3H)
    lens = len_ref[...]           # (B, 1) int32

    # Global T-block this invocation covers (matches the reversed index_map
    # used for the backward direction).
    jb = (1 - d) * j + d * (nT - 1 - j)

    def step(s, h):
        # Forward walks the tile 0..T_tile-1; backward walks it T_tile-1..0.
        local = (1 - d) * s + d * (T_tile - 1 - s)
        t_glob = jb * T_tile + local

        gi_t = gi_ref[local]                                   # (B, 3H)
        # Single fused hidden-gate matmul on the serial path.
        gh = jnp.dot(h, whh, preferred_element_type=jnp.float32) + bhh

        r = jax.nn.sigmoid(gi_t[:, :H] + gh[:, :H])
        z = jax.nn.sigmoid(gi_t[:, H:2 * H] + gh[:, H:2 * H])
        n = jnp.tanh(gi_t[:, 2 * H:] + r * gh[:, 2 * H:])
        h_new = (1.0 - z) * n + z * h

        # packed-sequence semantics from lengths (no full-size mask input):
        m = (lens > t_glob).astype(jnp.float32)                # (B, 1)
        out_ref[local] = (h_new * m).astype(out_ref.dtype)     # padded out -> 0
        return h * (1.0 - m) + h_new * m                       # freeze h past len

    h_final = jax.lax.fori_loop(0, T_tile, step, h_ref[...],
                                unroll=min(T_tile, 8))
    h_ref[...] = h_final
    hN_ref[...] = h_final.astype(hN_ref.dtype)


def bigru_pallas(embedded, input_lengths, w_ih, w_hh, b_ih, b_hh, *, t_tile=None):
    """Bidirectional GRU over (T, B, H) with packed-sequence semantics.

    w_ih, w_hh: (2, H, 3H)  (== PyTorch (3H, H) weight transposed, [r|z|n])
    b_ih, b_hh: (2, 1, 3H)
    Returns (out_dirs (2,T,B,H), hidden (2,B,H)).
    """
    T, B, H = embedded.shape
    if t_tile is None:
        t_tile = T
    assert T % t_tile == 0, "T must be divisible by t_tile"
    nT = T // t_tile

    # Hoisted input projection: ONE big lane-dense matmul per direction,
    # done by XLA as a pre-pass (removed from the serial recurrence).
    gi = jnp.einsum("tbh,dhg->dtbg", embedded, w_ih) + b_ih[:, None]  # (2,T,B,3H)
    lens = input_lengths.reshape(B, 1).astype(jnp.int32)

    # Backward direction reads/writes T-blocks in reversed order (no flipped
    # copies of the data are ever materialized).
    def t_block_index(d, j):
        return (d, (1 - d) * j + d * (nT - 1 - j), 0, 0)

    out_dirs, hidden = pl.pallas_call(
        _bigru_kernel,
        grid=(2, nT),
        in_specs=[
            pl.BlockSpec((B, 1), lambda d, j: (0, 0)),                  # lengths
            pl.BlockSpec((None, t_tile, B, 3 * H), t_block_index),      # gi
            pl.BlockSpec((None, H, 3 * H), lambda d, j: (d, 0, 0)),     # W_hh
            pl.BlockSpec((None, 1, 3 * H), lambda d, j: (d, 0, 0)),     # b_hh
        ],
        out_specs=(
            pl.BlockSpec((None, t_tile, B, H), t_block_index),          # outputs
            pl.BlockSpec((None, B, H), lambda d, j: (d, 0, 0)),         # final h
        ),
        out_shape=(
            jax.ShapeDtypeStruct((2, T, B, H), jnp.float32),
            jax.ShapeDtypeStruct((2, B, H), jnp.float32),
        ),
        scratch_shapes=[pltpu.VMEM((B, H), jnp.float32)],               # h carry
        compiler_params=pltpu.CompilerParams(
            dimension_semantics=("parallel", "arbitrary")),
    )(lens, gi, w_hh, b_hh)
    return out_dirs, hidden


# -----------------------------------------------------------------------------
# EncoderRNN forward (embedding + bidirectional GRU, directions summed).
# -----------------------------------------------------------------------------
def encoder_rnn_forward(params, input_seq, input_lengths, *, t_tile=None):
    """input_seq: (T, B) int32, input_lengths: (B,) int32 (sorted descending)."""
    embedded = params["emb"][input_seq]                  # (T, B, H) f32 gather
    out_dirs, hidden = bigru_pallas(
        embedded, input_lengths,
        params["w_ih"], params["w_hh"], params["b_ih"], params["b_hh"],
        t_tile=t_tile)
    outputs = out_dirs[0] + out_dirs[1]                  # sum of directions
    return outputs, hidden                               # (T,B,H), (2,B,H)


# -----------------------------------------------------------------------------
# Pure-JAX reference (same math, lax.scan) for correctness checking.
# -----------------------------------------------------------------------------
def _gru_dir_ref(gi_all, lengths, w_hh, b_hh, reverse):
    T, B, G = gi_all.shape
    H = G // 3
    ts = jnp.arange(T, dtype=jnp.int32)

    def step(h, inp):
        gi_t, t = inp
        gh = h @ w_hh + b_hh
        r = jax.nn.sigmoid(gi_t[:, :H] + gh[:, :H])
        z = jax.nn.sigmoid(gi_t[:, H:2 * H] + gh[:, H:2 * H])
        n = jnp.tanh(gi_t[:, 2 * H:] + r * gh[:, 2 * H:])
        h_new = (1.0 - z) * n + z * h
        m = (lengths[:, None] > t).astype(jnp.float32)
        out_t = h_new * m
        return h * (1.0 - m) + h_new * m, out_t

    h0 = jnp.zeros((B, H), jnp.float32)
    hT, outs = jax.lax.scan(step, h0, (gi_all, ts), reverse=reverse)
    return outs, hT


def encoder_rnn_ref(params, input_seq, input_lengths):
    embedded = params["emb"][input_seq]
    gi = jnp.einsum("tbh,dhg->dtbg", embedded, params["w_ih"]) \
        + params["b_ih"][:, None]
    out_f, h_f = _gru_dir_ref(gi[0], input_lengths,
                              params["w_hh"][0], params["b_hh"][0], False)
    out_b, h_b = _gru_dir_ref(gi[1], input_lengths,
                              params["w_hh"][1], params["b_hh"][1], True)
    return out_f + out_b, jnp.stack([h_f, h_b], axis=0)


# -----------------------------------------------------------------------------
# Deterministic parameter init (shapes from the PyTorch module __init__).
# Weights stored in fused layout: (direction, H_in, 3H_out), gate order
# [r, z, n] along the last axis  == transpose of PyTorch's (3H, H) stack.
# -----------------------------------------------------------------------------
def init_params(key, vocab_size, hidden_size):
    H = hidden_size
    k = 1.0 / np.sqrt(H)
    k_emb, k1, k2, k3, k4 = jax.random.split(key, 5)
    emb = jax.random.normal(k_emb, (vocab_size, H), jnp.float32)  # nn.Embedding

    def u(kk, shape):
        return jax.random.uniform(kk, shape, jnp.float32, minval=-k, maxval=k)

    return {
        "emb": emb,
        "w_ih": u(k1, (2, H, 3 * H)),
        "w_hh": u(k2, (2, H, 3 * H)),
        "b_ih": u(k3, (2, 1, 3 * H)),
        "b_hh": u(k4, (2, 1, 3 * H)),
    }


if __name__ == "__main__":
    # NOTE: for real deployments pick H a multiple of 128 and B a multiple of 8
    # so the gate / output lane dims are dense; the toy dims below only check
    # correctness.
    T, B, H, VOCAB = 8, 2, 32, 20

    key = jax.random.PRNGKey(0)
    kp, ks = jax.random.split(key)
    params = init_params(kp, VOCAB, H)

    # pack_padded_sequence requires lengths sorted descending.
    input_lengths = jnp.array([8, 5], dtype=jnp.int32)
    input_seq = jax.random.randint(ks, (T, B), 0, VOCAB, dtype=jnp.int32)
    pad_mask = jnp.arange(T)[:, None] < input_lengths[None, :]
    input_seq = jnp.where(pad_mask, input_seq, 0)   # zero-pad past each length

    fwd = jax.jit(functools.partial(encoder_rnn_forward, params, t_tile=4))
    outputs, hidden = fwd(input_seq, input_lengths)
    jax.block_until_ready((outputs, hidden))

    # correctness check against pure-JAX reference
    ref_out, ref_hid = encoder_rnn_ref(params, input_seq, input_lengths)
    assert outputs.shape == (T, B, H) and hidden.shape == (2, B, H)
    np.testing.assert_allclose(np.asarray(outputs), np.asarray(ref_out),
                               rtol=1e-3, atol=1e-3)
    np.testing.assert_allclose(np.asarray(hidden), np.asarray(ref_hid),
                               rtol=1e-3, atol=1e-3)

    print("KERNEL_OK")
</pallas_src>

<mosaic_0001>
module attributes {stable_mosaic.version = 11 : i64} {
  func.func @_bigru_kernel(%arg0: i32, %arg1: i32, %arg2: memref<2x1xi32, #tpu.memory_space<vmem>>, %arg3: memref<1x4x2x96xf32, #tpu.memory_space<vmem>>, %arg4: memref<1x32x96xf32, #tpu.memory_space<vmem>>, %arg5: memref<1x1x96xf32, #tpu.memory_space<vmem>>, %arg6: memref<1x4x2x32xf32, #tpu.memory_space<vmem>>, %arg7: memref<1x2x32xf32, #tpu.memory_space<vmem>>, %arg8: memref<2x32xf32, #tpu.memory_space<vmem>>) attributes {dimension_semantics = [#tpu.dimension_semantics<parallel>, #tpu.dimension_semantics<arbitrary>], iteration_bounds = array<i64: 2, 2>, scalar_prefetch = 0 : i64, scratch_operands = 1 : i64, tpu.core_type = #tpu.core_type<tc>, window_params = [{pipeline_mode = #tpu.pipeline_mode<synchronous>, transform_indices = @transform_0, window_bounds = array<i64: 2, 1>}, {transform_indices = @transform_1, window_bounds = array<i64: 1, 4, 2, 96>}, {transform_indices = @transform_2, window_bounds = array<i64: 1, 32, 96>}, {transform_indices = @transform_3, window_bounds = array<i64: 1, 1, 96>}, {transform_indices = @transform_4, window_bounds = array<i64: 1, 4, 2, 32>}, {transform_indices = @transform_5, window_bounds = array<i64: 1, 2, 32>}]} {
    %c0_i32 = arith.constant 0 : i32
    %0 = arith.cmpi eq, %arg1, %c0_i32 : i32
    %1 = arith.extui %0 : i1 to i32
    %c0_i32_0 = arith.constant 0 : i32
    %2 = arith.cmpi ne, %1, %c0_i32_0 : i32
    scf.if %2 {
      %cst_73 = arith.constant 0.000000e+00 : f32
      %242 = vector.broadcast %cst_73 : f32 to vector<2x32xf32>
      %c0_74 = arith.constant 0 : index
      %c0_75 = arith.constant 0 : index
      %243 = vector.load %arg8[%c0_74, %c0_75] : memref<2x32xf32, #tpu.memory_space<vmem>>, vector<2x32xf32>
      tpu.vector_store %arg8[%c0_74, %c0_75], %242 {strides = array<i32>} : memref<2x32xf32, #tpu.memory_space<vmem>>, vector<2x32xf32>,
    } else {
    }
    %c0 = arith.constant 0 : index
    %c0_1 = arith.constant 0 : index
    %c0_2 = arith.constant 0 : index
    %3 = vector.load %arg4[%c0, %c0_1, %c0_2] : memref<1x32x96xf32, #tpu.memory_space<vmem>>, vector<1x32x96xf32>
    %4 = vector.shape_cast %3 : vector<1x32x96xf32> to vector<32x96xf32>
    %c0_3 = arith.constant 0 : index
    %c0_4 = arith.constant 0 : index
    %c0_5 = arith.constant 0 : index
    %5 = vector.load %arg5[%c0_3, %c0_4, %c0_5] : memref<1x1x96xf32, #tpu.memory_space<vmem>>, vector<1x1x96xf32>
    %6 = vector.shape_cast %5 : vector<1x1x96xf32> to vector<1x96xf32>
    %c0_6 = arith.constant 0 : index
    %c0_7 = arith.constant 0 : index
    %7 = vector.load %arg2[%c0_6, %c0_7] : memref<2x1xi32, #tpu.memory_space<vmem>>, vector<2x1xi32>
    %c1_i32 = arith.constant 1 : i32
    %8 = arith.subi %c1_i32, %arg0 : i32
    %9 = arith.muli %8, %arg1 : i32
    %c1_i32_8 = arith.constant 1 : i32
    %10 = arith.subi %c1_i32_8, %arg1 : i32
    %11 = arith.muli %arg0, %10 : i32
    %12 = arith.addi %9, %11 : i32
    %c0_9 = arith.constant 0 : index
    %c0_10 = arith.constant 0 : index
    %13 = vector.load %arg8[%c0_9, %c0_10] : memref<2x32xf32, #tpu.memory_space<vmem>>, vector<2x32xf32>
    %c0_i32_11 = arith.constant 0 : i32
    %c1_i32_12 = arith.constant 1 : i32
    %14 = arith.subi %c1_i32_12, %arg0 : i32
    %15 = arith.muli %14, %c0_i32_11 : i32
    %c3_i32 = arith.constant 3 : i32
    %16 = arith.subi %c3_i32, %c0_i32_11 : i32
    %17 = arith.muli %arg0, %16 : i32
    %18 = arith.addi %15, %17 : i32
    %c4_i32 = arith.constant 4 : i32
    %19 = arith.muli %12, %c4_i32 : i32
    %20 = arith.addi %19, %18 : i32
    %c0_13 = arith.constant 0 : index
    %21 = arith.index_cast %18 : i32 to index
    %c0_14 = arith.constant 0 : index
    %c0_15 = arith.constant 0 : index
    %22 = vector.load %arg3[%c0_13, %21, %c0_14, %c0_15] : memref<1x4x2x96xf32, #tpu.memory_space<vmem>>, vector<1x1x2x96xf32>
    %23 = vector.shape_cast %22 : vector<1x1x2x96xf32> to vector<2x96xf32>
    %cst = arith.constant dense<0.000000e+00> : vector<2x96xf32>
    %24 = tpu.matmul %13, %4, %cst {dimension_numbers = #tpu.dot_dimension_numbers<[1], [0], [0], [1], [0, 0, 1, 1], [], []>} : vector<2x32xf32>, vector<32x96xf32>, vector<2x96xf32> -> vector<2x96xf32>
    %25 = vector.broadcast %6 : vector<1x96xf32> to vector<2x96xf32>
    %26 = arith.addf %24, %25 : vector<2x96xf32>
    %27 = vector.extract_strided_slice %23 {offsets = [0, 0], sizes = [2, 32], strides = [1, 1]} : vector<2x96xf32> to vector<2x32xf32>
    %28 = vector.extract_strided_slice %26 {offsets = [0, 0], sizes = [2, 32], strides = [1, 1]} : vector<2x96xf32> to vector<2x32xf32>
    %29 = arith.addf %27, %28 : vector<2x32xf32>
    %30 = arith.negf %29 : vector<2x32xf32>
    %31 = math.exp %30 : vector<2x32xf32>
    %cst_16 = arith.constant 1.000000e+00 : f32
    %32 = vector.broadcast %cst_16 : f32 to vector<2x32xf32>
    %33 = arith.addf %32, %31 : vector<2x32xf32>
    %34 = arith.divf %32, %33 : vector<2x32xf32>
    %35 = vector.extract_strided_slice %23 {offsets = [0, 32], sizes = [2, 32], strides = [1, 1]} : vector<2x96xf32> to vector<2x32xf32>
    %36 = vector.extract_strided_slice %26 {offsets = [0, 32], sizes = [2, 32], strides = [1, 1]} : vector<2x96xf32> to vector<2x32xf32>
    %37 = arith.addf %35, %36 : vector<2x32xf32>
    %38 = arith.negf %37 : vector<2x32xf32>
    %39 = math.exp %38 : vector<2x32xf32>
    %cst_17 = arith.constant 1.000000e+00 : f32
    %40 = vector.broadcast %cst_17 : f32 to vector<2x32xf32>
    %41 = arith.addf %40, %39 : vector<2x32xf32>
    %42 = arith.divf %40, %41 : vector<2x32xf32>
    %43 = vector.extract_strided_slice %23 {offsets = [0, 64], sizes = [2, 32], strides = [1, 1]} : vector<2x96xf32> to vector<2x32xf32>
    %44 = vector.extract_strided_slice %26 {offsets = [0, 64], sizes = [2, 32], strides = [1, 1]} : vector<2x96xf32> to vector<2x32xf32>
    %45 = arith.mulf %34, %44 : vector<2x32xf32>
    %46 = arith.addf %43, %45 : vector<2x32xf32>
    %47 = math.tanh %46 : vector<2x32xf32>
    %cst_18 = arith.constant 1.000000e+00 : f32
    %48 = vector.broadcast %cst_18 : f32 to vector<2x32xf32>
    %49 = arith.subf %48, %42 : vector<2x32xf32>
    %50 = arith.mulf %49, %47 : vector<2x32xf32>
    %51 = arith.mulf %42, %13 : vector<2x32xf32>
    %52 = arith.addf %50, %51 : vector<2x32xf32>
    %53 = vector.broadcast %20 : i32 to vector<2x1xi32>
    %54 = arith.cmpi sgt, %7, %53 : vector<2x1xi32>
    %55 = arith.extui %54 : vector<2x1xi1> to vector<2x1xi32>
    %56 = arith.sitofp %55 : vector<2x1xi32> to vector<2x1xf32>
    %57 = vector.broadcast %56 : vector<2x1xf32> to vector<2x32xf32>
    %58 = arith.mulf %52, %57 : vector<2x32xf32>
    %c0_19 = arith.constant 0 : index
    %59 = arith.index_cast %18 : i32 to index
    %c0_20 = arith.constant 0 : index
    %c0_21 = arith.constant 0 : index
    %60 = vector.load %arg6[%c0_19, %59, %c0_20, %c0_21] : memref<1x4x2x32xf32, #tpu.memory_space<vmem>>, vector<1x1x2x32xf32>
    %61 = vector.shape_cast %60 : vector<1x1x2x32xf32> to vector<2x32xf32>
    %62 = vector.shape_cast %58 : vector<2x32xf32> to vector<1x1x2x32xf32>
    tpu.vector_store %arg6[%c0_19, %59, %c0_20, %c0_21], %62 {strides = array<i32>} : memref<1x4x2x32xf32, #tpu.memory_space<vmem>>, vector<1x1x2x32xf32>,
    %cst_22 = arith.constant 1.000000e+00 : f32
    %63 = vector.broadcast %cst_22 : f32 to vector<2x1xf32>
    %64 = arith.subf %63, %56 : vector<2x1xf32>
    %65 = vector.broadcast %64 : vector<2x1xf32> to vector<2x32xf32>
    %66 = arith.mulf %13, %65 : vector<2x32xf32>
    %67 = vector.broadcast %56 : vector<2x1xf32> to vector<2x32xf32>
    %68 = arith.mulf %52, %67 : vector<2x32xf32>
    %69 = arith.addf %66, %68 : vector<2x32xf32>
    %c1_i32_23 = arith.constant 1 : i32
    %c1_i32_24 = arith.constant 1 : i32
    %70 = arith.subi %c1_i32_24, %arg0 : i32
    %71 = arith.muli %70, %c1_i32_23 : i32
    %c3_i32_25 = arith.constant 3 : i32
    %72 = arith.subi %c3_i32_25, %c1_i32_23 : i32
    %73 = arith.muli %arg0, %72 : i32
    %74 = arith.addi %71, %73 : i32
    %c4_i32_26 = arith.constant 4 : i32
    %75 = arith.muli %12, %c4_i32_26 : i32
    %76 = arith.addi %75, %74 : i32
    %c0_27 = arith.constant 0 : index
    %77 = arith.index_cast %74 : i32 to index
    %c0_28 = arith.constant 0 : index
    %c0_29 = arith.constant 0 : index
    %78 = vector.load %arg3[%c0_27, %77, %c0_28, %c0_29] : memref<1x4x2x96xf32, #tpu.memory_space<vmem>>, vector<1x1x2x96xf32>
    %79 = vector.shape_cast %78 : vector<1x1x2x96xf32> to vector<2x96xf32>
    %cst_30 = arith.constant dense<0.000000e+00> : vector<2x96xf32>
    %80 = tpu.matmul %69, %4, %cst_30 {dimension_numbers = #tpu.dot_dimension_numbers<[1], [0], [0], [1], [0, 0, 1, 1], [], []>} : vector<2x32xf32>, vector<32x96xf32>, vector<2x96xf32> -> vector<2x96xf32>
    %81 = vector.broadcast %6 : vector<1x96xf32> to vector<2x96xf32>
    %82 = arith.addf %80, %81 : vector<2x96xf32>
    %83 = vector.extract_strided_slice %79 {offsets = [0, 0], sizes = [2, 32], strides = [1, 1]} : vector<2x96xf32> to vector<2x32xf32>
    %84 = vector.extract_strided_slice %82 {offsets = [0, 0], sizes = [2, 32], strides = [1, 1]} : vector<2x96xf32> to vector<2x32xf32>
    %85 = arith.addf %83, %84 : vector<2x32xf32>
    %86 = arith.negf %85 : vector<2x32xf32>
    %87 = math.exp %86 : vector<2x32xf32>
    %cst_31 = arith.constant 1.000000e+00 : f32
    %88 = vector.broadcast %cst_31 : f32 to vector<2x32xf32>
    %89 = arith.addf %88, %87 : vector<2x32xf32>
    %90 = arith.divf %88, %89 : vector<2x32xf32>
    %91 = vector.extract_strided_slice %79 {offsets = [0, 32], sizes = [2, 32], strides = [1, 1]} : vector<2x96xf32> to vector<2x32xf32>
    %92 = vector.extract_strided_slice %82 {offsets = [0, 32], sizes = [2, 32], strides = [1, 1]} : vector<2x96xf32> to vector<2x32xf32>
    %93 = arith.addf %91, %92 : vector<2x32xf32>
    %94 = arith.negf %93 : vector<2x32xf32>
    %95 = math.exp %94 : vector<2x32xf32>
    %cst_32 = arith.constant 1.000000e+00 : f32
    %96 = vector.broadcast %cst_32 : f32 to vector<2x32xf32>
    %97 = arith.addf %96, %95 : vector<2x32xf32>
    %98 = arith.divf %96, %97 : vector<2x32xf32>
    %99 = vector.extract_strided_slice %79 {offsets = [0, 64], sizes = [2, 32], strides = [1, 1]} : vector<2x96xf32> to vector<2x32xf32>
    %100 = vector.extract_strided_slice %82 {offsets = [0, 64], sizes = [2, 32], strides = [1, 1]} : vector<2x96xf32> to vector<2x32xf32>
    %101 = arith.mulf %90, %100 : vector<2x32xf32>
    %102 = arith.addf %99, %101 : vector<2x32xf32>
    %103 = math.tanh %102 : vector<2x32xf32>
    %cst_33 = arith.constant 1.000000e+00 : f32
    %104 = vector.broadcast %cst_33 : f32 to vector<2x32xf32>
    %105 = arith.subf %104, %98 : vector<2x32xf32>
    %106 = arith.mulf %105, %103 : vector<2x32xf32>
    %107 = arith.mulf %98, %69 : vector<2x32xf32>
    %108 = arith.addf %106, %107 : vector<2x32xf32>
    %109 = vector.broadcast %76 : i32 to vector<2x1xi32>
    %110 = arith.cmpi sgt, %7, %109 : vector<2x1xi32>
    %111 = arith.extui %110 : vector<2x1xi1> to vector<2x1xi32>
    %112 = arith.sitofp %111 : vector<2x1xi32> to vector<2x1xf32>
    %113 = vector.broadcast %112 : vector<2x1xf32> to vector<2x32xf32>
    %114 = arith.mulf %108, %113 : vector<2x32xf32>
    %c0_34 = arith.constant 0 : index
    %115 = arith.index_cast %74 : i32 to index
    %c0_35 = arith.constant 0 : index
    %c0_36 = arith.constant 0 : index
    %116 = vector.load %arg6[%c0_34, %115, %c0_35, %c0_36] : memref<1x4x2x32xf32, #tpu.memory_space<vmem>>, vector<1x1x2x32xf32>
    %117 = vector.shape_cast %116 : vector<1x1x2x32xf32> to vector<2x32xf32>
    %118 = vector.shape_cast %114 : vector<2x32xf32> to vector<1x1x2x32xf32>
    tpu.vector_store %arg6[%c0_34, %115, %c0_35, %c0_36], %118 {strides = array<i32>} : memref<1x4x2x32xf32, #tpu.memory_space<vmem>>, vector<1x1x2x32xf32>,
    %cst_37 = arith.constant 1.000000e+00 : f32
    %119 = vector.broadcast %cst_37 : f32 to vector<2x1xf32>
    %120 = arith.subf %119, %112 : vector<2x1xf32>
    %121 = vector.broadcast %120 : vector<2x1xf32> to vector<2x32xf32>
    %122 = arith.mulf %69, %121 : vector<2x32xf32>
    %123 = vector.broadcast %112 : vector<2x1xf32> to vector<2x32xf32>
    %124 = arith.mulf %108, %123 : vector<2x32xf32>
    %125 = arith.addf %122, %124 : vector<2x32xf32>
    %c2_i32 = arith.constant 2 : i32
    %c1_i32_38 = arith.constant 1 : i32
    %126 = arith.subi %c1_i32_38, %arg0 : i32
    %127 = arith.muli %126, %c2_i32 : i32
    %c3_i32_39 = arith.constant 3 : i32
    %128 = arith.subi %c3_i32_39, %c2_i32 : i32
    %129 = arith.muli %arg0, %128 : i32
    %130 = arith.addi %127, %129 : i32
    %c4_i32_40 = arith.constant 4 : i32
    %131 = arith.muli %12, %c4_i32_40 : i32
    %132 = arith.addi %131, %130 : i32
    %c0_41 = arith.constant 0 : index
    %133 = arith.index_cast %130 : i32 to index
    %c0_42 = arith.constant 0 : index
    %c0_43 = arith.constant 0 : index
    %134 = vector.load %arg3[%c0_41, %133, %c0_42, %c0_43] : memref<1x4x2x96xf32, #tpu.memory_space<vmem>>, vector<1x1x2x96xf32>
    %135 = vector.shape_cast %134 : vector<1x1x2x96xf32> to vector<2x96xf32>
    %cst_44 = arith.constant dense<0.000000e+00> : vector<2x96xf32>
    %136 = tpu.matmul %125, %4, %cst_44 {dimension_numbers = #tpu.dot_dimension_numbers<[1], [0], [0], [1], [0, 0, 1, 1], [], []>} : vector<2x32xf32>, vector<32x96xf32>, vector<2x96xf32> -> vector<2x96xf32>
    %137 = vector.broadcast %6 : vector<1x96xf32> to vector<2x96xf32>
    %138 = arith.addf %136, %137 : vector<2x96xf32>
    %139 = vector.extract_strided_slice %135 {offsets = [0, 0], sizes = [2, 32], strides = [1, 1]} : vector<2x96xf32> to vector<2x32xf32>
    %140 = vector.extract_strided_slice %138 {offsets = [0, 0], sizes = [2, 32], strides = [1, 1]} : vector<2x96xf32> to vector<2x32xf32>
    %141 = arith.addf %139, %140 : vector<2x32xf32>
    %142 = arith.negf %141 : vector<2x32xf32>
    %143 = math.exp %142 : vector<2x32xf32>
    %cst_45 = arith.constant 1.000000e+00 : f32
    %144 = vector.broadcast %cst_45 : f32 to vector<2x32xf32>
    %145 = arith.addf %144, %143 : vector<2x32xf32>
    %146 = arith.divf %144, %145 : vector<2x32xf32>
    %147 = vector.extract_strided_slice %135 {offsets = [0, 32], sizes = [2, 32], strides = [1, 1]} : vector<2x96xf32> to vector<2x32xf32>
    %148 = vector.extract_strided_slice %138 {offsets = [0, 32], sizes = [2, 32], strides = [1, 1]} : vector<2x96xf32> to vector<2x32xf32>
    %149 = arith.addf %147, %148 : vector<2x32xf32>
    %150 = arith.negf %149 : vector<2x32xf32>
    %151 = math.exp %150 : vector<2x32xf32>
    %cst_46 = arith.constant 1.000000e+00 : f32
    %152 = vector.broadcast %cst_46 : f32 to vector<2x32xf32>
    %153 = arith.addf %152, %151 : vector<2x32xf32>
    %154 = arith.divf %152, %153 : vector<2x32xf32>
    %155 = vector.extract_strided_slice %135 {offsets = [0, 64], sizes = [2, 32], strides = [1, 1]} : vector<2x96xf32> to vector<2x32xf32>
    %156 = vector.extract_strided_slice %138 {offsets = [0, 64], sizes = [2, 32], strides = [1, 1]} : vector<2x96xf32> to vector<2x32xf32>
    %157 = arith.mulf %146, %156 : vector<2x32xf32>
    %158 = arith.addf %155, %157 : vector<2x32xf32>
    %159 = math.tanh %158 : vector<2x32xf32>
    %cst_47 = arith.constant 1.000000e+00 : f32
    %160 = vector.broadcast %cst_47 : f32 to vector<2x32xf32>
    %161 = arith.subf %160, %154 : vector<2x32xf32>
    %162 = arith.mulf %161, %159 : vector<2x32xf32>
    %163 = arith.mulf %154, %125 : vector<2x32xf32>
    %164 = arith.addf %162, %163 : vector<2x32xf32>
    %165 = vector.broadcast %132 : i32 to vector<2x1xi32>
    %166 = arith.cmpi sgt, %7, %165 : vector<2x1xi32>
    %167 = arith.extui %166 : vector<2x1xi1> to vector<2x1xi32>
    %168 = arith.sitofp %167 : vector<2x1xi32> to vector<2x1xf32>
    %169 = vector.broadcast %168 : vector<2x1xf32> to vector<2x32xf32>
    %170 = arith.mulf %164, %169 : vector<2x32xf32>
    %c0_48 = arith.constant 0 : index
    %171 = arith.index_cast %130 : i32 to index
    %c0_49 = arith.constant 0 : index
    %c0_50 = arith.constant 0 : index
    %172 = vector.load %arg6[%c0_48, %171, %c0_49, %c0_50] : memref<1x4x2x32xf32, #tpu.memory_space<vmem>>, vector<1x1x2x32xf32>
    %173 = vector.shape_cast %172 : vector<1x1x2x32xf32> to vector<2x32xf32>
    %174 = vector.shape_cast %170 : vector<2x32xf32> to vector<1x1x2x32xf32>
    tpu.vector_store %arg6[%c0_48, %171, %c0_49, %c0_50], %174 {strides = array<i32>} : memref<1x4x2x32xf32, #tpu.memory_space<vmem>>, vector<1x1x2x32xf32>,
    %cst_51 = arith.constant 1.000000e+00 : f32
    %175 = vector.broadcast %cst_51 : f32 to vector<2x1xf32>
    %176 = arith.subf %175, %168 : vector<2x1xf32>
    %177 = vector.broadcast %176 : vector<2x1xf32> to vector<2x32xf32>
    %178 = arith.mulf %125, %177 : vector<2x32xf32>
    %179 = vector.broadcast %168 : vector<2x1xf32> to vector<2x32xf32>
    %180 = arith.mulf %164, %179 : vector<2x32xf32>
    %181 = arith.addf %178, %180 : vector<2x32xf32>
    %c3_i32_52 = arith.constant 3 : i32
    %c1_i32_53 = arith.constant 1 : i32
    %182 = arith.subi %c1_i32_53, %arg0 : i32
    %183 = arith.muli %182, %c3_i32_52 : i32
    %c3_i32_54 = arith.constant 3 : i32
    %184 = arith.subi %c3_i32_54, %c3_i32_52 : i32
    %185 = arith.muli %arg0, %184 : i32
    %186 = arith.addi %183, %185 : i32
    %c4_i32_55 = arith.constant 4 : i32
    %187 = arith.muli %12, %c4_i32_55 : i32
    %188 = arith.addi %187, %186 : i32
    %c0_56 = arith.constant 0 : index
    %189 = arith.index_cast %186 : i32 to index
    %c0_57 = arith.constant 0 : index
    %c0_58 = arith.constant 0 : index
    %190 = vector.load %arg3[%c0_56, %189, %c0_57, %c0_58] : memref<1x4x2x96xf32, #tpu.memory_space<vmem>>, vector<1x1x2x96xf32>
    %191 = vector.shape_cast %190 : vector<1x1x2x96xf32> to vector<2x96xf32>
    %cst_59 = arith.constant dense<0.000000e+00> : vector<2x96xf32>
    %192 = tpu.matmul %181, %4, %cst_59 {dimension_numbers = #tpu.dot_dimension_numbers<[1], [0], [0], [1], [0, 0, 1, 1], [], []>} : vector<2x32xf32>, vector<32x96xf32>, vector<2x96xf32> -> vector<2x96xf32>
    %193 = vector.broadcast %6 : vector<1x96xf32> to vector<2x96xf32>
    %194 = arith.addf %192, %193 : vector<2x96xf32>
    %195 = vector.extract_strided_slice %191 {offsets = [0, 0], sizes = [2, 32], strides = [1, 1]} : vector<2x96xf32> to vector<2x32xf32>
    %196 = vector.extract_strided_slice %194 {offsets = [0, 0], sizes = [2, 32], strides = [1, 1]} : vector<2x96xf32> to vector<2x32xf32>
    %197 = arith.addf %195, %196 : vector<2x32xf32>
    %198 = arith.negf %197 : vector<2x32xf32>
    %199 = math.exp %198 : vector<2x32xf32>
    %cst_60 = arith.constant 1.000000e+00 : f32
    %200 = vector.broadcast %cst_60 : f32 to vector<2x32xf32>
    %201 = arith.addf %200, %199 : vector<2x32xf32>
    %202 = arith.divf %200, %201 : vector<2x32xf32>
    %203 = vector.extract_strided_slice %191 {offsets = [0, 32], sizes = [2, 32], strides = [1, 1]} : vector<2x96xf32> to vector<2x32xf32>
    %204 = vector.extract_strided_slice %194 {offsets = [0, 32], sizes = [2, 32], strides = [1, 1]} : vector<2x96xf32> to vector<2x32xf32>
    %205 = arith.addf %203, %204 : vector<2x32xf32>
    %206 = arith.negf %205 : vector<2x32xf32>
    %207 = math.exp %206 : vector<2x32xf32>
    %cst_61 = arith.constant 1.000000e+00 : f32
    %208 = vector.broadcast %cst_61 : f32 to vector<2x32xf32>
    %209 = arith.addf %208, %207 : vector<2x32xf32>
    %210 = arith.divf %208, %209 : vector<2x32xf32>
    %211 = vector.extract_strided_slice %191 {offsets = [0, 64], sizes = [2, 32], strides = [1, 1]} : vector<2x96xf32> to vector<2x32xf32>
    %212 = vector.extract_strided_slice %194 {offsets = [0, 64], sizes = [2, 32], strides = [1, 1]} : vector<2x96xf32> to vector<2x32xf32>
    %213 = arith.mulf %202, %212 : vector<2x32xf32>
    %214 = arith.addf %211, %213 : vector<2x32xf32>
    %215 = math.tanh %214 : vector<2x32xf32>
    %cst_62 = arith.constant 1.000000e+00 : f32
    %216 = vector.broadcast %cst_62 : f32 to vector<2x32xf32>
    %217 = arith.subf %216, %210 : vector<2x32xf32>
    %218 = arith.mulf %217, %215 : vector<2x32xf32>
    %219 = arith.mulf %210, %181 : vector<2x32xf32>
    %220 = arith.addf %218, %219 : vector<2x32xf32>
    %221 = vector.broadcast %188 : i32 to vector<2x1xi32>
    %222 = arith.cmpi sgt, %7, %221 : vector<2x1xi32>
    %223 = arith.extui %222 : vector<2x1xi1> to vector<2x1xi32>
    %224 = arith.sitofp %223 : vector<2x1xi32> to vector<2x1xf32>
    %225 = vector.broadcast %224 : vector<2x1xf32> to vector<2x32xf32>
    %226 = arith.mulf %220, %225 : vector<2x32xf32>
    %c0_63 = arith.constant 0 : index
    %227 = arith.index_cast %186 : i32 to index
    %c0_64 = arith.constant 0 : index
    %c0_65 = arith.constant 0 : index
    %228 = vector.load %arg6[%c0_63, %227, %c0_64, %c0_65] : memref<1x4x2x32xf32, #tpu.memory_space<vmem>>, vector<1x1x2x32xf32>
    %229 = vector.shape_cast %228 : vector<1x1x2x32xf32> to vector<2x32xf32>
    %230 = vector.shape_cast %226 : vector<2x32xf32> to vector<1x1x2x32xf32>
    tpu.vector_store %arg6[%c0_63, %227, %c0_64, %c0_65], %230 {strides = array<i32>} : memref<1x4x2x32xf32, #tpu.memory_space<vmem>>, vector<1x1x2x32xf32>,
    %cst_66 = arith.constant 1.000000e+00 : f32
    %231 = vector.broadcast %cst_66 : f32 to vector<2x1xf32>
    %232 = arith.subf %231, %224 : vector<2x1xf32>
    %233 = vector.broadcast %232 : vector<2x1xf32> to vector<2x32xf32>
    %234 = arith.mulf %181, %233 : vector<2x32xf32>
    %235 = vector.broadcast %224 : vector<2x1xf32> to vector<2x32xf32>
    %236 = arith.mulf %220, %235 : vector<2x32xf32>
    %237 = arith.addf %234, %236 : vector<2x32xf32>
    %c4_i32_67 = arith.constant 4 : i32
    %c0_68 = arith.constant 0 : index
    %c0_69 = arith.constant 0 : index
    %238 = vector.load %arg8[%c0_68, %c0_69] : memref<2x32xf32, #tpu.memory_space<vmem>>, vector<2x32xf32>
    tpu.vector_store %arg8[%c0_68, %c0_69], %237 {strides = array<i32>} : memref<2x32xf32, #tpu.memory_space<vmem>>, vector<2x32xf32>,
    %c0_70 = arith.constant 0 : index
    %c0_71 = arith.constant 0 : index
    %c0_72 = arith.constant 0 : index
    %239 = vector.load %arg7[%c0_70, %c0_71, %c0_72] : memref<1x2x32xf32, #tpu.memory_space<vmem>>, vector<1x2x32xf32>
    %240 = vector.shape_cast %239 : vector<1x2x32xf32> to vector<2x32xf32>
    %241 = vector.shape_cast %237 : vector<2x32xf32> to vector<1x2x32xf32>
    tpu.vector_store %arg7[%c0_70, %c0_71, %c0_72], %241 {strides = array<i32>} : memref<1x2x32xf32, #tpu.memory_space<vmem>>, vector<1x2x32xf32>,
    return
  }
  func.func @transform_0(%arg0: i32, %arg1: i32) -> (i32, i32) {
    %c0_i32 = arith.constant 0 : i32
    %c0_i32_0 = arith.constant 0 : i32
    %c0_i32_1 = arith.constant 0 : i32
    return %c0_i32, %c0_i32_0 : i32, i32
  }
  func.func @transform_1(%arg0: i32, %arg1: i32) -> (i32, i32, i32, i32) {
    %c1_i32 = arith.constant 1 : i32
    %0 = arith.subi %c1_i32, %arg0 : i32
    %1 = arith.muli %0, %arg1 : i32
    %c1_i32_0 = arith.constant 1 : i32
    %2 = arith.subi %c1_i32_0, %arg1 : i32
    %3 = arith.muli %arg0, %2 : i32
    %4 = arith.addi %1, %3 : i32
    %c0_i32 = arith.constant 0 : i32
    %c0_i32_1 = arith.constant 0 : i32
    %c0_i32_2 = arith.constant 0 : i32
    return %arg0, %4, %c0_i32, %c0_i32_1 : i32, i32, i32, i32
  }
  func.func @transform_2(%arg0: i32, %arg1: i32) -> (i32, i32, i32) {
    %c0_i32 = arith.constant 0 : i32
    %c0_i32_0 = arith.constant 0 : i32
    %c0_i32_1 = arith.constant 0 : i32
    return %arg0, %c0_i32, %c0_i32_0 : i32, i32, i32
  }
  func.func @transform_3(%arg0: i32, %arg1: i32) -> (i32, i32, i32) {
    %c0_i32 = arith.constant 0 : i32
    %c0_i32_0 = arith.constant 0 : i32
    %c0_i32_1 = arith.constant 0 : i32
    return %arg0, %c0_i32, %c0_i32_0 : i32, i32, i32
  }
  func.func @transform_4(%arg0: i32, %arg1: i32) -> (i32, i32, i32, i32) {
    %c1_i32 = arith.constant 1 : i32
    %0 = arith.subi %c1_i32, %arg0 : i32
    %1 = arith.muli %0, %arg1 : i32
    %c1_i32_0 = arith.constant 1 : i32
    %2 = arith.subi %c1_i32_0, %arg1 : i32
    %3 = arith.muli %arg0, %2 : i32
    %4 = arith.addi %1, %3 : i32
    %c0_i32 = arith.constant 0 : i32
    %c0_i32_1 = arith.constant 0 : i32
    %c0_i32_2 = arith.constant 0 : i32
    return %arg0, %4, %c0_i32, %c0_i32_1 : i32, i32, i32, i32
  }
  func.func @transform_5(%arg0: i32, %arg1: i32) -> (i32, i32, i32) {
    %c0_i32 = arith.constant 0 : i32
    %c0_i32_0 = arith.constant 0 : i32
    %c0_i32_1 = arith.constant 0 : i32
    return %arg0, %c0_i32, %c0_i32_0 : i32, i32, i32
  }
}

</mosaic_0001>

<llo_original>
// kernel: encoder_rnn_forward.1
$region0: #{encoder_rnn_forward.1}
  #allocation0 [shape = 'u32[]', space=smem, size = 0x4, offset = 0x4, fixed_abs, tag = 'smem constant byte address 0x4 - core index']
  #allocation1 [shape = 'u32[72,128]{1,0:T(1,128)}', space=vmem, size = 0x9000, scoped, tag = 'internal scratch']
  #allocation2 [shape = 'f32[2,32]{1,0:T(2,128)}', space=vmem, size = 0x400, scoped, tag = 'scratch operand']
  %s0 = inlined_call_operand.vmem [shape: s32[2,1], index: 0, kind: input, shape index: {}]
  %s1 = inlined_call_operand.vmem [shape: f32[2,8,2,96], index: 1, kind: input, shape index: {}]
  %s2 = inlined_call_operand.vmem [shape: f32[2,32,96], index: 2, kind: input, shape index: {}]
  %s3 = inlined_call_operand.vmem [shape: f32[2,1,96], index: 3, kind: input, shape index: {}]
  %s4 = inlined_call_operand.vmem [shape: f32[2,8,2,32], index: 4, kind: output, shape index: {0}]
  %s5 = inlined_call_operand.hbm [shape: f32[2,2,32], index: 5, kind: output, shape index: {1}]
  %6 = xla_tuple %s4, %s5
  %s7 = sld [smem:[#allocation0]]
  $region61: #{encoder_rnn_forward.1} parent=0
    _
  %s9 = ssub.s32 1, %s7
  %s10 = scalar_select 0, %s9, %s7
  $region1: #{encoder_rnn_forward.1} parent=0
    #allocation3 [shape = 'u8[2048]{0}', space=vmem, size = 0x800, scoped, tag = 'output window, operand 1']
    #allocation4 [shape = 's32[2]{0}', space=sflag, size = 0x8, scoped, tag = 'scoped memory for encoder_rnn_forward.1']
    %11 = vsyncpa [#allocation4], 0
    %s12 = scalar_lea.sflag [#allocation4], 1
    %13 = vsyncpa %s12, 0
    loop: start=0, step=1, limit=6
    $region2: #{encoder_rnn_forward.1} parent=1 // loop_pre_header
      _
    $region3: #{encoder_rnn_forward.1} parent=1 // loop_header
      %s15 = sphi 0, %s19
      %p16 = scmp.ge.s32.totalorder %s15, 6
      %s22 = sphi 0, %s34
      %s23 = sphi 0, %s30
      %s24 = sphi 0, %s22
      %s25 = sphi 0, %s23
      %s26 = sphi 0, %s24
      %s27 = sphi 0, %s25
      %s35 = sphi 0, %s35
      %s37 = sphi 0, %s35
      %s38 = sphi 0, %s37
      %s52 = sphi 0, %s38
      %s70 = sphi 0, %s72
      %s73 = sphi 0, %s70
      %s74 = sphi 0, %s73
      %s90 = sphi 0, %s74
      %s96 = sphi 0, %s98
      %s99 = sphi 0, %s96
      %s100 = sphi 0, %s99
      %s116 = sphi 0, %s100
      %s122 = sphi 0, %s124
      %s125 = sphi 0, %s122
      %s126 = sphi 0, %s125
      %s142 = sphi 0, %s126
      %s160 = sphi 0, %s162
      %s163 = sphi 0, %s160
      %s164 = sphi 0, %s163
      %s180 = sphi 0, %s164
      %s186 = sphi 0, %s188
      %s189 = sphi 0, %s186
      %s190 = sphi 0, %s189
      %s206 = sphi 0, %s190
    $region4: #{encoder_rnn_forward.1} parent=1 // loop_header_branch
      %18 = sbr.rel (%p16) target = $region8
    $region5: #{encoder_rnn_forward.1} parent=1 // loop_body
      %s20 = ssub.s32 %s15, 1
      %s21 = ssub.s32 %s15, 2
      %s28 = sadd.s32 1, %s23
      %p29 = scmp.ge.s32.totalorder %s28, 2
      %s30 = scalar_select %p29, 0, %s28
      %s31 = sadd.s32 1, %s22
      %s32 = scalar_select %p29, %s31, %s22
      %p33 = scmp.ge.s32.totalorder %s32, 2
      %s34 = scalar_select %p33, 0, %s32
      %s36 = sadd.s32 %s35, 1
      %p39 = scmp.eq.s32.totalorder %s15, 3
      %p40 = scmp.ne.s32.totalorder %s35, %s37
      %p41 = scmp.eq.s32.totalorder %s15, 0
      %p42 = por %p40, %p41
      %p43 = scmp.ne.s32.totalorder %s35, %s37
      %p44 = scmp.eq.s32.totalorder %s20, 3
      %p45 = por %p43, %p44
      %p46 = scmp.ne.s32.totalorder %s37, %s38
      %p47 = scmp.eq.s32.totalorder %s20, 0
      %p48 = por %p46, %p47
      %p49 = scmp.ne.s32.totalorder %s37, %s38
      %p50 = scmp.eq.s32.totalorder %s21, 3
      %p51 = por %p49, %p50
      %p53 = scmp.ne.s32.totalorder %s38, %s52
      %p54 = scmp.eq.s32.totalorder %s21, 0
      %p55 = por %p53, %p54
      %s56 = ssub.s32 1, %s22
      %s57 = smul.u32 %s56, %s23
      %s58 = ssub.s32 1, %s23
      %s59 = smul.u32 %s22, %s58
      %s60 = sadd.s32 %s57, %s59
      %s61 = ssub.s32 1, %s34
      %s62 = smul.u32 %s61, %s30
      %s63 = ssub.s32 1, %s30
      %s64 = smul.u32 %s34, %s63
      %s65 = sadd.s32 %s62, %s64
      %s66 = ssub.s32 %s22, %s34
      %s67 = ssub.s32 %s60, %s65
      %s68 = sor.u32 %s66, %s67
      %p69 = scmp.eq.s32.totalorder %s68, 0
      %s71 = sadd.s32 %s70, 1
      %s72 = scalar_select %p69, %s70, %s71
      %p75 = pneg %p69
      %p76 = scmp.eq.s32.totalorder %s15, 3
      %p77 = por %p75, %p76
      %p78 = scmp.ne.s32.totalorder %s70, %s73
      %p79 = scmp.eq.s32.totalorder %s15, 0
      %p80 = por %p78, %p79
      %p81 = scmp.ne.s32.totalorder %s70, %s73
      %p82 = scmp.eq.s32.totalorder %s20, 3
      %p83 = por %p81, %p82
      %p84 = scmp.ne.s32.totalorder %s73, %s74
      %p85 = scmp.eq.s32.totalorder %s20, 0
      %p86 = por %p84, %p85
      %p87 = scmp.ne.s32.totalorder %s73, %s74
      %p88 = scmp.eq.s32.totalorder %s21, 3
      %p89 = por %p87, %p88
      %p91 = scmp.ne.s32.totalorder %s74, %s90
      %p92 = scmp.eq.s32.totalorder %s21, 0
      %p93 = por %p91, %p92
      %s94 = ssub.s32 %s22, %s34
      %p95 = scmp.eq.s32.totalorder %s94, 0
      %s97 = sadd.s32 %s96, 1
      %s98 = scalar_select %p95, %s96, %s97
      %p101 = pneg %p95
      %p102 = scmp.eq.s32.totalorder %s15, 3
      %p103 = por %p101, %p102
      %p104 = scmp.ne.s32.totalorder %s96, %s99
      %p105 = scmp.eq.s32.totalorder %s15, 0
      %p106 = por %p104, %p105
      %p107 = scmp.ne.s32.totalorder %s96, %s99
      %p108 = scmp.eq.s32.totalorder %s20, 3
      %p109 = por %p107, %p108
      %p110 = scmp.ne.s32.totalorder %s99, %s100
      %p111 = scmp.eq.s32.totalorder %s20, 0
      %p112 = por %p110, %p111
      %p113 = scmp.ne.s32.totalorder %s99, %s100
      %p114 = scmp.eq.s32.totalorder %s21, 3
      %p115 = por %p113, %p114
      %p117 = scmp.ne.s32.totalorder %s100, %s116
      %p118 = scmp.eq.s32.totalorder %s21, 0
      %p119 = por %p117, %p118
      %s120 = ssub.s32 %s22, %s34
      %p121 = scmp.eq.s32.totalorder %s120, 0
      %s123 = sadd.s32 %s122, 1
      %s124 = scalar_select %p121, %s122, %s123
      %p127 = pneg %p121
      %p128 = scmp.eq.s32.totalorder %s15, 3
      %p129 = por %p127, %p128
      %p130 = scmp.ne.s32.totalorder %s122, %s125
      %p131 = scmp.eq.s32.totalorder %s15, 0
      %p132 = por %p130, %p131
      %p133 = scmp.ne.s32.totalorder %s122, %s125
      %p134 = scmp.eq.s32.totalorder %s20, 3
      %p135 = por %p133, %p134
      %p136 = scmp.ne.s32.totalorder %s125, %s126
      %p137 = scmp.eq.s32.totalorder %s20, 0
      %p138 = por %p136, %p137
      %p139 = scmp.ne.s32.totalorder %s125, %s126
      %p140 = scmp.eq.s32.totalorder %s21, 3
      %p141 = por %p139, %p140
      %p143 = scmp.ne.s32.totalorder %s126, %s142
      %p144 = scmp.eq.s32.totalorder %s21, 0
      %p145 = por %p143, %p144
      %s146 = ssub.s32 1, %s22
      %s147 = smul.u32 %s146, %s23
      %s148 = ssub.s32 1, %s23
      %s149 = smul.u32 %s22, %s148
      %s150 = sadd.s32 %s147, %s149
      %s151 = ssub.s32 1, %s34
      %s152 = smul.u32 %s151, %s30
      %s153 = ssub.s32 1, %s30
      %s154 = smul.u32 %s34, %s153
      %s155 = sadd.s32 %s152, %s154
      %s156 = ssub.s32 %s22, %s34
      %s157 = ssub.s32 %s150, %s155
      %s158 = sor.u32 %s156, %s157
      %p159 = scmp.eq.s32.totalorder %s158, 0
      %s161 = sadd.s32 %s160, 1
      %s162 = scalar_select %p159, %s160, %s161
      %p165 = pneg %p159
      %p166 = scmp.eq.s32.totalorder %s15, 3
      %p167 = por %p165, %p166
      %p168 = scmp.ne.s32.totalorder %s160, %s163
      %p169 = scmp.eq.s32.totalorder %s15, 0
      %p170 = por %p168, %p169
      %p171 = scmp.ne.s32.totalorder %s160, %s163
      %p172 = scmp.eq.s32.totalorder %s20, 3
      %p173 = por %p171, %p172
      %p174 = scmp.ne.s32.totalorder %s163, %s164
      %p175 = scmp.eq.s32.totalorder %s20, 0
      %p176 = por %p174, %p175
      %p177 = scmp.ne.s32.totalorder %s163, %s164
      %p178 = scmp.eq.s32.totalorder %s21, 3
      %p179 = por %p177, %p178
      %p181 = scmp.ne.s32.totalorder %s164, %s180
      %p182 = scmp.eq.s32.totalorder %s21, 0
      %p183 = por %p181, %p182
      %s184 = ssub.s32 %s22, %s34
      %p185 = scmp.eq.s32.totalorder %s184, 0
      %s187 = sadd.s32 %s186, 1
      %s188 = scalar_select %p185, %s186, %s187
      %p191 = pneg %p185
      %p192 = scmp.eq.s32.totalorder %s15, 3
      %p193 = por %p191, %p192
      %p194 = scmp.ne.s32.totalorder %s186, %s189
      %p195 = scmp.eq.s32.totalorder %s15, 0
      %p196 = por %p194, %p195
      %p197 = scmp.ne.s32.totalorder %s186, %s189
      %p198 = scmp.eq.s32.totalorder %s20, 3
      %p199 = por %p197, %p198
      %p200 = scmp.ne.s32.totalorder %s189, %s190
      %p201 = scmp.eq.s32.totalorder %s20, 0
      %p202 = por %p200, %p201
      %p203 = scmp.ne.s32.totalorder %s189, %s190
      %p204 = scmp.eq.s32.totalorder %s21, 3
      %p205 = por %p203, %p204
      %p207 = scmp.ne.s32.totalorder %s190, %s206
      %p208 = scmp.eq.s32.totalorder %s21, 0
      %p209 = por %p207, %p208
      %p210 = scmp.le.s32.totalorder 1, %s15
      %p211 = scmp.lt.s32.totalorder %s15, 5
      %p212 = pnand %p210, %p211
      %p213 = pneg %p212
      // Predicated region
      $region9: #{encoder_rnn_forward.1} parent=5 // pred_check
        _
      $region10: #{encoder_rnn_forward.1} parent=5 // pred_check_branch
        %215 = sbr.rel (%p212) target = $region12
      $region11: #{encoder_rnn_forward.1} parent=5 // pred_region
        %s216 = ssub.s32 %s15, 1
        // Predicated region
        $region13: #{encoder_rnn_forward.1} parent=11 // pred_check
          %p217 = pneg %p48
        $region14: #{encoder_rnn_forward.1} parent=11 // pred_check_branch
          %219 = sbr.rel (%p217) target = $region16
        $region15: #{encoder_rnn_forward.1} parent=11 // pred_region
          _
        $region16: #{encoder_rnn_forward.1} parent=11 // pred_fallthru
          _
      $region12: #{encoder_rnn_forward.1} parent=5 // pred_fallthru
        _
      %p220 = scmp.lt.s32.totalorder %s15, 4
      // Predicated region
      $region17: #{encoder_rnn_forward.1} parent=5 // pred_check
        %p221 = pneg %p220
      $region18: #{encoder_rnn_forward.1} parent=5 // pred_check_branch
        %223 = sbr.rel (%p221) target = $region20
      $region19: #{encoder_rnn_forward.1} parent=5 // pred_region
        // Predicated region
        $region21: #{encoder_rnn_forward.1} parent=19 // pred_check
          %p224 = pneg %p80
        $region22: #{encoder_rnn_forward.1} parent=19 // pred_check_branch
          %226 = sbr.rel (%p224) target = $region24
        $region23: #{encoder_rnn_forward.1} parent=19 // pred_region
          %s227 = ssub.s32 1, %s22
          %s228 = smul.u32 %s227, %s23
          %s229 = ssub.s32 1, %s23
          %s230 = smul.u32 %s22, %s229
          %s231 = sadd.s32 %s228, %s230
          %s232 = smul.u32 4, %s231
          %p233 = scmp.lt.s32.totalorder %s22, 1
          %s234 = scalar_select %p233, %s22, 1
          %p235 = scmp.lt.s32.totalorder %s232, 7
          %s236 = scalar_select %p235, %s232, 7
          %s237 = smul.addr %s234, 8
          %s238 = sadd.s32 %s236, %s237
          %s239 = smul.addr %s238, 2
          %s240 = scalar_lea.vmem %s1, %s239
          %s241 = ssub.s32 1, %s22
          %s242 = smul.u32 %s241, %s23
          %s243 = ssub.s32 1, %s23
          %s244 = smul.u32 %s22, %s243
          %s245 = sadd.s32 %s242, %s244
          %s246 = smul.u32 4, %s245
        $region24: #{encoder_rnn_forward.1} parent=19 // pred_fallthru
          _
        // Predicated region
        $region25: #{encoder_rnn_forward.1} parent=19 // pred_check
          %p247 = pneg %p106
        $region26: #{encoder_rnn_forward.1} parent=19 // pred_check_branch
          %249 = sbr.rel (%p247) target = $region28
        $region27: #{encoder_rnn_forward.1} parent=19 // pred_region
          %p250 = scmp.lt.s32.totalorder %s22, 1
          %s251 = scalar_select %p250, %s22, 1
          %s252 = smul.addr %s251, 4
          %s253 = smul.addr %s252, 8
          %s254 = scalar_lea.vmem %s2, %s253
        $region28: #{encoder_rnn_forward.1} parent=19 // pred_fallthru
          _
        // Predicated region
        $region29: #{encoder_rnn_forward.1} parent=19 // pred_check
          %p255 = pneg %p132
        $region30: #{encoder_rnn_forward.1} parent=19 // pred_check_branch
          %257 = sbr.rel (%p255) target = $region32
        $region31: #{encoder_rnn_forward.1} parent=19 // pred_region
          %p258 = scmp.lt.s32.totalorder %s22, 1
          %s259 = scalar_select %p258, %s22, 1
          %s260 = scalar_lea.vmem %s3, %s259
        $region32: #{encoder_rnn_forward.1} parent=19 // pred_fallthru
          _
      $region20: #{encoder_rnn_forward.1} parent=5 // pred_fallthru
        _
      %p261 = scmp.le.s32.totalorder 1, %s15
      %p262 = scmp.lt.s32.totalorder %s15, 5
      %p263 = pnand %p261, %p262
      %p264 = pneg %p263
      // Predicated region
      $region33: #{encoder_rnn_forward.1} parent=5 // pred_check
        _
      $region34: #{encoder_rnn_forward.1} parent=5 // pred_check_branch
        %266 = sbr.rel (%p263) target = $region36
      $region35: #{encoder_rnn_forward.1} parent=5 // pred_region
        %s267 = ssub.s32 %s15, 1
        %p268 = pneg %p48
        %p269 = pneg %p45
        %s270 = ssub.s32 1, %s24
        %s271 = smul.u32 %s270, %s25
        %s272 = ssub.s32 1, %s25
        %s273 = smul.u32 %s24, %s272
        %s274 = sadd.s32 %s271, %s273
        %s275 = smul.u32 4, %s274
        %p276 = scmp.lt.s32.totalorder %s24, 1
        %s277 = scalar_select %p276, %s24, 1
        %p278 = scmp.lt.s32.totalorder %s275, 7
        %s279 = scalar_select %p278, %s275, 7
        %s280 = smul.addr %s277, 8
        %s281 = sadd.s32 %s279, %s280
        %s282 = smul.addr %s281, 2
        %s283 = scalar_lea.vmem %s1, %s282
        %p284 = pneg %p86
        %p285 = pneg %p83
        %p286 = scmp.lt.s32.totalorder %s24, 1
        %s287 = scalar_select %p286, %s24, 1
        %s288 = smul.addr %s287, 4
        %s289 = smul.addr %s288, 8
        %s290 = scalar_lea.vmem %s2, %s289
        %p291 = pneg %p112
        %p292 = pneg %p109
        %p293 = scmp.lt.s32.totalorder %s24, 1
        %s294 = scalar_select %p293, %s24, 1
        %s295 = scalar_lea.vmem %s3, %s294
        %p296 = pneg %p138
        %p297 = pneg %p135
        %p298 = pneg %p176
        %p299 = pneg %p173
        %s300 = ssub.s32 1, %s24
        %s301 = smul.u32 %s300, %s25
        %s302 = ssub.s32 1, %s25
        %s303 = smul.u32 %s24, %s302
        %s304 = sadd.s32 %s301, %s303
        %s305 = smul.u32 4, %s304
        %p306 = scmp.lt.s32.totalorder %s24, 1
        %s307 = scalar_select %p306, %s24, 1
        %p308 = scmp.lt.s32.totalorder %s305, 7
        %s309 = scalar_select %p308, %s305, 7
        %s310 = smul.addr %s307, 8
        %s311 = sadd.s32 %s309, %s310
        %s312 = smul.addr %s311, 2
        %s313 = scalar_lea.vmem %s4, %s312
        %p314 = pneg %p202
        %p315 = pneg %p199
        %s316 = sand.u32 %s189, 1
        %s317 = scalar_lea.sflag [#allocation4], %s316
        %s318 = sand.u32 %s189, 1
        %s319 = smul.addr %s318, 2
        %s320 = scalar_lea.vmem [#allocation3], %s319
        %s321 = ssub.s32 1, %s24
        %s322 = smul.u32 %s321, %s25
        %s323 = ssub.s32 1, %s25
        %s324 = smul.u32 %s24, %s323
        %s325 = sadd.s32 %s322, %s324
        %s326 = smul.u32 4, %s325
        %p327 = scmp.lt.s32.totalorder %s24, 1
        %s328 = scalar_select %p327, %s24, 1
        %p329 = scmp.lt.s32.totalorder %s326, 7
        %s330 = scalar_select %p329, %s326, 7
        %s331 = smul.addr %s328, 8
        %s332 = sadd.s32 %s330, %s331
        %s333 = smul.addr %s332, 2
        %s334 = scalar_lea.vmem %s1, %s333
        %s335 = ssub.s32 1, %s24
        %s336 = smul.u32 %s335, %s25
        %s337 = ssub.s32 1, %s25
        %s338 = smul.u32 %s24, %s337
        %s339 = sadd.s32 %s336, %s338
        %s340 = smul.u32 4, %s339
        %p341 = scmp.lt.s32.totalorder %s24, 1
        %s342 = scalar_select %p341, %s24, 1
        %s343 = smul.addr %s342, 4
        %s344 = smul.addr %s343, 8
        %s345 = scalar_lea.vmem %s2, %s344
        %p346 = scmp.lt.s32.totalorder %s24, 1
        %s347 = scalar_select %p346, %s24, 1
        %s348 = scalar_lea.vmem %s3, %s347
        %s349 = ssub.s32 1, %s24
        %s350 = smul.u32 %s349, %s25
        %s351 = ssub.s32 1, %s25
        %s352 = smul.u32 %s24, %s351
        %s353 = sadd.s32 %s350, %s352
        %s354 = smul.u32 4, %s353
        %p355 = scmp.lt.s32.totalorder %s24, 1
        %s356 = scalar_select %p355, %s24, 1
        %p357 = scmp.lt.s32.totalorder %s354, 7
        %s358 = scalar_select %p357, %s354, 7
        %s359 = smul.addr %s356, 8
        %s360 = sadd.s32 %s358, %s359
        %s361 = smul.addr %s360, 2
        %s362 = scalar_lea.vmem %s4, %s361
        %s363 = ssub.s32 1, %s24
        %s364 = smul.u32 %s363, %s25
        %s365 = ssub.s32 1, %s25
        %s366 = smul.u32 %s24, %s365
        %s367 = sadd.s32 %s364, %s366
        %s368 = smul.u32 4, %s367
        %p369 = scmp.eq.s32.totalorder %s25, 0
        // Predicated region
        $region37: #{encoder_rnn_forward.1} parent=35 // pred_check
          %p370 = pneg %p369
        $region38: #{encoder_rnn_forward.1} parent=35 // pred_check_branch
          %372 = sbr.rel (%p370) target = $region40
        $region39: #{encoder_rnn_forward.1} parent=35 // pred_region
          %vm373 = vcmask 254976
          %374 = vst.msk [vmem:[#allocation2] sm:$0x3] %vm373, 0.0
        $region40: #{encoder_rnn_forward.1} parent=35 // pred_fallthru
          _
        %v375 = vld [vmem:[%s345] sm:$0xff]
        %v376 = vld [vmem:[%s345 + $0x8] sm:$0xff]
        %v377 = vld [vmem:[%s345 + $0x10] sm:$0xff]
        %v378 = vld [vmem:[%s345 + $0x18] sm:$0xff]
        %v379 = vld [vmem:[%s348] sm:$0x1]
        %v380 = vld [vmem:[%s0] sm:$0x3]
        %s381 = ssub.s32 1, %s24
        %s382 = smul.u32 %s381, %s25
        %s383 = ssub.s32 1, %s25
        %s384 = smul.u32 %s24, %s383
        %s385 = sadd.s32 %s382, %s384
        %v386 = vld [vmem:[#allocation2] sm:$0x3]
        %s387 = smul.u32 %s24, 3
        %s388 = smul.u32 %s385, 4
        %s389 = sadd.s32 %s388, %s387
        %s390 = smul.u32 %s387, 2
        %s391 = scalar_lea.vmem %s334, %s390
        %v392 = vld [vmem:[%s391] sm:$0x3]
        %v394 = vperm.slane %v379, 0
        %vm396 = vcmask 261120
        %v398 = vsel %vm396, %v386, 0
        %400 = vmatpush.msra.mxu0 0.0
        %401 = vmatpush.msra.mxu0 0.0
        %402 = vmatpush.msra.mxu0 0.0
        %403 = vmatpush.msra.mxu0 0.0
        %404 = vmatpush.msra.mxu0 0.0
        %405 = vmatpush.msra.mxu0 0.0
        %406 = vmatpush.msra.mxu0 0.0
        %407 = vmatpush.msra.mxu0 0.0
        %408 = vmatpush.msra.mxu0 0.0
        %409 = vmatpush.msra.mxu0 0.0
        %410 = vmatpush.msra.mxu0 0.0
        %411 = vmatpush.msra.mxu0 0.0
        %412 = vmatpush.msra.mxu0 %v378
        %413 = vmatpush.msra.mxu0 %v377
        %414 = vmatpush.msra.mxu0 %v376
        %415 = vmatpush.msra.mxu0 %v375
        %416 = vmatmul.f32.gmra.mxu0 %v398
        %v417 = vpop.f32.mrf.mxu0
        %v418 = vadd.f32 %v394, %v417
        %419 = vdwg.mxu0
        %v420 = vadd.f32 %v392, %v418
        %v421 = vxor.u32 %v420, 2147483648
        %v422 = vmul.f32 %v421, 1.442695
        %v423 = vpow.pop %v422
        %v424 = vadd.f32 %v423, 1.0
        %v425 = vrcp.pop %v424
        %v426 = vmul.f32 %v424, %v425
        %v427 = vsub.f32 1.0, %v426
        %v428 = vmul.f32 %v425, %v427
        %v429 = vadd.f32 %v425, %v428
        %vm430 = vweird.f32 %v424
        %vm431 = vweird.f32 %v425
        %vm432 = vmor %vm430, %vm431
        %v433 = vsel %vm432, %v425, %v429
        %v434 = vand.u32 2147483647, %v424
        %vm435 = vcmp.eq.f32.partialorder %v434, 8.507059e+37
        %v436 = vand.u32 %v424, 2147483648
        %v437 = vor.u32 1.1754944e-38, %v436
        %v438 = vsel %vm435, %v437, %v433
        %v439 = vmul.f32 1.0, %v438
        %441 = vrot.lane.b32.xlu0 %v418, 64
        %v442 = vpop.permute.xlu0 %441
        %v444 = vmul.f32 %v439, %v442
        %446 = vrot.lane.b32.xlu0 %v444, 64
        %v447 = vpop.permute.xlu0 %446
        %v449 = vadd.f32 %v392, %v447
        %v450 = vtanh.pop %v449
        %v451 = vsub.f32 1.0, %v439
        %453 = vrot.lane.b32.xlu0 %v450, 96
        %v454 = vpop.permute.xlu0 %453
        %v456 = vmul.f32 %v451, %v454
        %457 = vrot.lane.b32.xlu0 %v386, 32
        %v458 = vpop.permute.xlu0 %457
        %v460 = vmul.f32 %v439, %v458
        %v461 = vadd.f32 %v456, %v460
        %v462 = vstv %s389
        %vm463 = vcmp.gt.s32.totalorder %v380, %v462
        %v464 = vsel %vm463, 1, 0
        %v465 = vcvt.s32.f32 %v464
        %467 = vset.pattern.permute.xlu0 0
        %468 = vperm.xlu0 %467, %v465
        %v469 = vpop.permute.xlu0 %468
        %v471 = vmul.f32 %v461, %v469
        %473 = vrot.lane.b32.xlu0 %v471, 96
        %v474 = vpop.permute.xlu0 %473
        %s476 = scalar_lea.vmem %s362, %s390
        %vm477 = vcmask 254976
        %478 = vst.msk [vmem:[%s476] sm:$0x3] %vm477, %v474
        %v479 = vsub.f32 1.0, %v465
        %481 = vset.pattern.permute.xlu0 0
        %482 = vperm.xlu0 %481, %v479
        %v483 = vpop.permute.xlu0 %482
        %v485 = vmul.f32 %v386, %v483
        %v486 = vadd.f32 %v485, %v474
        %s487 = smul.u32 %s24, 2
        %s488 = sadd.s32 %s381, %s487
        %s489 = sadd.s32 %s388, %s488
        %s490 = smul.u32 %s488, 2
        %s491 = scalar_lea.vmem %s334, %s490
        %v492 = vld [vmem:[%s491] sm:$0x3]
        %v494 = vsel %vm396, %v486, 0
        %496 = vmatpush.msra.mxu0 0.0
        %497 = vmatpush.msra.mxu0 0.0
        %498 = vmatpush.msra.mxu0 0.0
        %499 = vmatpush.msra.mxu0 0.0
        %500 = vmatpush.msra.mxu0 0.0
        %501 = vmatpush.msra.mxu0 0.0
        %502 = vmatpush.msra.mxu0 0.0
        %503 = vmatpush.msra.mxu0 0.0
        %504 = vmatpush.msra.mxu0 0.0
        %505 = vmatpush.msra.mxu0 0.0
        %506 = vmatpush.msra.mxu0 0.0
        %507 = vmatpush.msra.mxu0 0.0
        %508 = vmatpush.msra.mxu0 %v378
        %509 = vmatpush.msra.mxu0 %v377
        %510 = vmatpush.msra.mxu0 %v376
        %511 = vmatpush.msra.mxu0 %v375
        %512 = vmatmul.f32.gmra.mxu0 %v494
        %v513 = vpop.f32.mrf.mxu0
        %v514 = vadd.f32 %v394, %v513
        %515 = vdwg.mxu0
        %v516 = vadd.f32 %v492, %v514
        %v517 = vxor.u32 %v516, 2147483648
        %v518 = vmul.f32 %v517, 1.442695
        %v519 = vpow.pop %v518
        %v520 = vadd.f32 %v519, 1.0
        %v521 = vrcp.pop %v520
        %v522 = vmul.f32 %v520, %v521
        %v523 = vsub.f32 1.0, %v522
        %v524 = vmul.f32 %v521, %v523
        %v525 = vadd.f32 %v521, %v524
        %vm526 = vweird.f32 %v520
        %vm527 = vweird.f32 %v521
        %vm528 = vmor %vm526, %vm527
        %v529 = vsel %vm528, %v521, %v525
        %v530 = vand.u32 2147483647, %v520
        %vm531 = vcmp.eq.f32.partialorder %v530, 8.507059e+37
        %v532 = vand.u32 %v520, 2147483648
        %v533 = vor.u32 1.1754944e-38, %v532
        %v534 = vsel %vm531, %v533, %v529
        %v535 = vmul.f32 1.0, %v534
        %537 = vrot.lane.b32.xlu0 %v514, 64
        %v538 = vpop.permute.xlu0 %537
        %v540 = vmul.f32 %v535, %v538
        %542 = vrot.lane.b32.xlu0 %v540, 64
        %v543 = vpop.permute.xlu0 %542
        %v545 = vadd.f32 %v492, %v543
        %v546 = vtanh.pop %v545
        %v547 = vsub.f32 1.0, %v535
        %549 = vrot.lane.b32.xlu0 %v546, 96
        %v550 = vpop.permute.xlu0 %549
        %v552 = vmul.f32 %v547, %v550
        %553 = vrot.lane.b32.xlu0 %v486, 32
        %v554 = vpop.permute.xlu0 %553
        %v556 = vmul.f32 %v535, %v554
        %v557 = vadd.f32 %v552, %v556
        %v558 = vstv %s489
        %vm559 = vcmp.gt.s32.totalorder %v380, %v558
        %v560 = vsel %vm559, 1, 0
        %v561 = vcvt.s32.f32 %v560
        %563 = vset.pattern.permute.xlu0 0
        %564 = vperm.xlu0 %563, %v561
        %v565 = vpop.permute.xlu0 %564
        %v567 = vmul.f32 %v557, %v565
        %569 = vrot.lane.b32.xlu0 %v567, 96
        %v570 = vpop.permute.xlu0 %569
        %s572 = scalar_lea.vmem %s362, %s490
        %573 = vst.msk [vmem:[%s572] sm:$0x3] %vm477, %v570
        %v574 = vsub.f32 1.0, %v561
        %576 = vset.pattern.permute.xlu0 0
        %577 = vperm.xlu0 %576, %v574
        %v578 = vpop.permute.xlu0 %577
        %v580 = vmul.f32 %v486, %v578
        %v581 = vadd.f32 %v580, %v570
        %s582 = smul.u32 %s381, 2
        %s583 = sadd.s32 %s582, %s24
        %s584 = sadd.s32 %s388, %s583
        %s585 = smul.u32 %s583, 2
        %s586 = scalar_lea.vmem %s334, %s585
        %v587 = vld [vmem:[%s586] sm:$0x3]
        %v589 = vsel %vm396, %v581, 0
        %591 = vmatpush.msra.mxu0 0.0
        %592 = vmatpush.msra.mxu0 0.0
        %593 = vmatpush.msra.mxu0 0.0
        %594 = vmatpush.msra.mxu0 0.0
        %595 = vmatpush.msra.mxu0 0.0
        %596 = vmatpush.msra.mxu0 0.0
        %597 = vmatpush.msra.mxu0 0.0
        %598 = vmatpush.msra.mxu0 0.0
        %599 = vmatpush.msra.mxu0 0.0
        %600 = vmatpush.msra.mxu0 0.0
        %601 = vmatpush.msra.mxu0 0.0
        %602 = vmatpush.msra.mxu0 0.0
        %603 = vmatpush.msra.mxu0 %v378
        %604 = vmatpush.msra.mxu0 %v377
        %605 = vmatpush.msra.mxu0 %v376
        %606 = vmatpush.msra.mxu0 %v375
        %607 = vmatmul.f32.gmra.mxu0 %v589
        %v608 = vpop.f32.mrf.mxu0
        %v609 = vadd.f32 %v394, %v608
        %610 = vdwg.mxu0
        %v611 = vadd.f32 %v587, %v609
        %v612 = vxor.u32 %v611, 2147483648
        %v613 = vmul.f32 %v612, 1.442695
        %v614 = vpow.pop %v613
        %v615 = vadd.f32 %v614, 1.0
        %v616 = vrcp.pop %v615
        %v617 = vmul.f32 %v615, %v616
        %v618 = vsub.f32 1.0, %v617
        %v619 = vmul.f32 %v616, %v618
        %v620 = vadd.f32 %v616, %v619
        %vm621 = vweird.f32 %v615
        %vm622 = vweird.f32 %v616
        %vm623 = vmor %vm621, %vm622
        %v624 = vsel %vm623, %v616, %v620
        %v625 = vand.u32 2147483647, %v615
        %vm626 = vcmp.eq.f32.partialorder %v625, 8.507059e+37
        %v627 = vand.u32 %v615, 2147483648
        %v628 = vor.u32 1.1754944e-38, %v627
        %v629 = vsel %vm626, %v628, %v624
        %v630 = vmul.f32 1.0, %v629
        %632 = vrot.lane.b32.xlu0 %v609, 64
        %v633 = vpop.permute.xlu0 %632
        %v635 = vmul.f32 %v630, %v633
        %637 = vrot.lane.b32.xlu0 %v635, 64
        %v638 = vpop.permute.xlu0 %637
        %v640 = vadd.f32 %v587, %v638
        %v641 = vtanh.pop %v640
        %v642 = vsub.f32 1.0, %v630
        %644 = vrot.lane.b32.xlu0 %v641, 96
        %v645 = vpop.permute.xlu0 %644
        %v647 = vmul.f32 %v642, %v645
        %648 = vrot.lane.b32.xlu0 %v581, 32
        %v649 = vpop.permute.xlu0 %648
        %v651 = vmul.f32 %v630, %v649
        %v652 = vadd.f32 %v647, %v651
        %v653 = vstv %s584
        %vm654 = vcmp.gt.s32.totalorder %v380, %v653
        %v655 = vsel %vm654, 1, 0
        %v656 = vcvt.s32.f32 %v655
        %658 = vset.pattern.permute.xlu0 0
        %659 = vperm.xlu0 %658, %v656
        %v660 = vpop.permute.xlu0 %659
        %v662 = vmul.f32 %v652, %v660
        %664 = vrot.lane.b32.xlu0 %v662, 96
        %v665 = vpop.permute.xlu0 %664
        %s667 = scalar_lea.vmem %s362, %s585
        %668 = vst.msk [vmem:[%s667] sm:$0x3] %vm477, %v665
        %v669 = vsub.f32 1.0, %v656
        %671 = vset.pattern.permute.xlu0 0
        %672 = vperm.xlu0 %671, %v669
        %v673 = vpop.permute.xlu0 %672
        %v675 = vmul.f32 %v581, %v673
        %v676 = vadd.f32 %v675, %v665
        %s677 = smul.u32 %s381, 3
        %s678 = sadd.s32 %s388, %s677
        %s679 = smul.u32 %s677, 2
        %s680 = scalar_lea.vmem %s334, %s679
        %v681 = vld [vmem:[%s680] sm:$0x3]
        %v683 = vsel %vm396, %v676, 0
        %685 = vmatpush.msra.mxu0 0.0
        %686 = vmatpush.msra.mxu0 0.0
        %687 = vmatpush.msra.mxu0 0.0
        %688 = vmatpush.msra.mxu0 0.0
        %689 = vmatpush.msra.mxu0 0.0
        %690 = vmatpush.msra.mxu0 0.0
        %691 = vmatpush.msra.mxu0 0.0
        %692 = vmatpush.msra.mxu0 0.0
        %693 = vmatpush.msra.mxu0 0.0
        %694 = vmatpush.msra.mxu0 0.0
        %695 = vmatpush.msra.mxu0 0.0
        %696 = vmatpush.msra.mxu0 0.0
        %697 = vmatpush.msra.mxu0 %v378
        %698 = vmatpush.msra.mxu0 %v377
        %699 = vmatpush.msra.mxu0 %v376
        %700 = vmatpush.msra.mxu0 %v375
        %701 = vmatmul.f32.gmra.mxu0 %v683
        %v702 = vpop.f32.mrf.mxu0
        %v703 = vadd.f32 %v394, %v702
        %704 = vdwg.mxu0
        %v705 = vadd.f32 %v681, %v703
        %v706 = vxor.u32 %v705, 2147483648
        %v707 = vmul.f32 %v706, 1.442695
        %v708 = vpow.pop %v707
        %v709 = vadd.f32 %v708, 1.0
        %v710 = vrcp.pop %v709
        %v711 = vmul.f32 %v709, %v710
        %v712 = vsub.f32 1.0, %v711
        %v713 = vmul.f32 %v710, %v712
        %v714 = vadd.f32 %v710, %v713
        %vm715 = vweird.f32 %v709
        %vm716 = vweird.f32 %v710
        %vm717 = vmor %vm715, %vm716
        %v718 = vsel %vm717, %v710, %v714
        %v719 = vand.u32 2147483647, %v709
        %vm720 = vcmp.eq.f32.partialorder %v719, 8.507059e+37
        %v721 = vand.u32 %v709, 2147483648
        %v722 = vor.u32 1.1754944e-38, %v721
        %v723 = vsel %vm720, %v722, %v718
        %v724 = vmul.f32 1.0, %v723
        %726 = vrot.lane.b32.xlu0 %v703, 64
        %v727 = vpop.permute.xlu0 %726
        %v729 = vmul.f32 %v724, %v727
        %731 = vrot.lane.b32.xlu0 %v729, 64
        %v732 = vpop.permute.xlu0 %731
        %v734 = vadd.f32 %v681, %v732
        %v735 = vtanh.pop %v734
        %v736 = vsub.f32 1.0, %v724
        %738 = vrot.lane.b32.xlu0 %v735, 96
        %v739 = vpop.permute.xlu0 %738
        %v741 = vmul.f32 %v736, %v739
        %742 = vrot.lane.b32.xlu0 %v676, 32
        %v743 = vpop.permute.xlu0 %742
        %v745 = vmul.f32 %v724, %v743
        %v746 = vadd.f32 %v741, %v745
        %v747 = vstv %s678
        %vm748 = vcmp.gt.s32.totalorder %v380, %v747
        %v749 = vsel %vm748, 1, 0
        %v750 = vcvt.s32.f32 %v749
        %752 = vset.pattern.permute.xlu0 0
        %753 = vperm.xlu0 %752, %v750
        %v754 = vpop.permute.xlu0 %753
        %v756 = vmul.f32 %v746, %v754
        %758 = vrot.lane.b32.xlu0 %v756, 96
        %v759 = vpop.permute.xlu0 %758
        %s761 = scalar_lea.vmem %s362, %s679
        %762 = vst.msk [vmem:[%s761] sm:$0x3] %vm477, %v759
        %v763 = vsub.f32 1.0, %v750
        %765 = vset.pattern.permute.xlu0 0
        %766 = vperm.xlu0 %765, %v763
        %v767 = vpop.permute.xlu0 %766
        %v769 = vmul.f32 %v676, %v767
        %v770 = vadd.f32 %v769, %v759
        %771 = vst.msk [vmem:[#allocation2] sm:$0x3] %vm477, %v770
        %772 = vst.msk [vmem:[%s320] sm:$0x3] %vm477, %v770
        %s773 = ssub.s32 1, %s24
        %s774 = smul.u32 %s773, %s25
        %s775 = ssub.s32 1, %s25
        %s776 = smul.u32 %s24, %s775
        %s777 = sadd.s32 %s774, %s776
        %s778 = smul.u32 4, %s777
        %p779 = scmp.lt.s32.totalorder %s24, 1
        %s780 = scalar_select %p779, %s24, 1
        %p781 = scmp.lt.s32.totalorder %s778, 7
        %s782 = scalar_select %p781, %s778, 7
        %s783 = smul.addr %s780, 8
        %s784 = sadd.s32 %s782, %s783
        %s785 = smul.addr %s784, 2
        %s786 = scalar_lea.vmem %s4, %s785
        %s787 = sand.u32 %s189, 1
        %s788 = scalar_lea.sflag [#allocation4], %s787
        %s789 = sand.u32 %s189, 1
        %s790 = smul.addr %s789, 2
        %s791 = scalar_lea.vmem [#allocation3], %s790
        // Predicated region
        $region41: #{encoder_rnn_forward.1} parent=35 // pred_check
          %p792 = pneg %p173
        $region42: #{encoder_rnn_forward.1} parent=35 // pred_check_branch
          %794 = sbr.rel (%p792) target = $region44
        $region43: #{encoder_rnn_forward.1} parent=35 // pred_region
          %s795 = ssub.s32 1, %s24
          %s796 = smul.u32 %s795, %s25
          %s797 = ssub.s32 1, %s25
          %s798 = smul.u32 %s24, %s797
          %s799 = sadd.s32 %s796, %s798
          %s800 = smul.u32 4, %s799
        $region44: #{encoder_rnn_forward.1} parent=35 // pred_fallthru
          _
        // Predicated region
        $region45: #{encoder_rnn_forward.1} parent=35 // pred_check
          %p801 = pneg %p199
        $region46: #{encoder_rnn_forward.1} parent=35 // pred_check_branch
          %803 = sbr.rel (%p801) target = $region48
        $region47: #{encoder_rnn_forward.1} parent=35 // pred_region
          %805 = vsyncadd %s788, 0
          %s806 = smul.addr %s24, 2
          %s807 = scalar_lea.hbm %s5, %s806
          %s809 = sshll.u32 %s791, 4
          %s810 = int_to_ptr.vmem [resolvable:$true] %s809
          %s811 = sshll.u32 %s807, 4
          %s812 = int_to_ptr.hbm [resolvable:$true] %s811
          %814 = dma.vmem_to_hbm [thread:$0]  %s810, 32, %s812, %s788
        $region48: #{encoder_rnn_forward.1} parent=35 // pred_fallthru
          _
      $region36: #{encoder_rnn_forward.1} parent=5 // pred_fallthru
        _
      %p815 = scmp.le.s32.totalorder 2, %s15
      // Predicated region
      $region49: #{encoder_rnn_forward.1} parent=5 // pred_check
        %p816 = pneg %p815
      $region50: #{encoder_rnn_forward.1} parent=5 // pred_check_branch
        %818 = sbr.rel (%p816) target = $region52
      $region51: #{encoder_rnn_forward.1} parent=5 // pred_region
        %s819 = ssub.s32 %s15, 2
        // Predicated region
        $region53: #{encoder_rnn_forward.1} parent=51 // pred_check
          %p820 = pneg %p179
        $region54: #{encoder_rnn_forward.1} parent=51 // pred_check_branch
          %822 = sbr.rel (%p820) target = $region56
        $region55: #{encoder_rnn_forward.1} parent=51 // pred_region
          %s823 = ssub.s32 1, %s26
          %s824 = smul.u32 %s823, %s27
          %s825 = ssub.s32 1, %s27
          %s826 = smul.u32 %s26, %s825
          %s827 = sadd.s32 %s824, %s826
          %s828 = smul.u32 4, %s827
          %p829 = scmp.lt.s32.totalorder %s26, 1
          %s830 = scalar_select %p829, %s26, 1
          %p831 = scmp.lt.s32.totalorder %s828, 7
          %s832 = scalar_select %p831, %s828, 7
          %s833 = smul.addr %s830, 8
          %s834 = sadd.s32 %s832, %s833
          %s835 = smul.addr %s834, 2
          %s836 = scalar_lea.vmem %s4, %s835
        $region56: #{encoder_rnn_forward.1} parent=51 // pred_fallthru
          _
        // Predicated region
        $region57: #{encoder_rnn_forward.1} parent=51 // pred_check
          %p837 = pneg %p205
        $region58: #{encoder_rnn_forward.1} parent=51 // pred_check_branch
          %839 = sbr.rel (%p837) target = $region60
        $region59: #{encoder_rnn_forward.1} parent=51 // pred_region
          %s840 = sand.u32 %s190, 1
          %s841 = scalar_lea.sflag [#allocation4], %s840
          %s842 = sand.u32 %s190, 1
          %s843 = smul.addr %s842, 2
          %s844 = scalar_lea.vmem [#allocation3], %s843
          %846 = dma.done %s841, 32
        $region60: #{encoder_rnn_forward.1} parent=51 // pred_fallthru
          _
      $region52: #{encoder_rnn_forward.1} parent=5 // pred_fallthru
        _
    $region6: #{encoder_rnn_forward.1} parent=1 // loop_footer
      %s19 = sadd.s32 1, %s15
    $region7: #{encoder_rnn_forward.1} parent=1 // loop_footer_branch
      %14 = sbr.rel target = $region3
    $region8: #{encoder_rnn_forward.1} parent=1 // loop_exit
      _
    %847 = vsyncpa [#allocation4], 1
    %s848 = scalar_lea.sflag [#allocation4], 1
    %849 = vsyncpa %s848, 1

</llo_original>
